<compile_context>
chip_gen: v5e
topology: v5e:2x2
jax: 0.10.0
libtpu: 0.0.40
codegen_flags: <defaults>
</compile_context>

<pallas_src>
import functools

import jax
import jax.numpy as jnp
from jax.experimental import pallas as pl
from jax.experimental.pallas import tpu as pltpu

_EPS = 1e-5          # nn.BatchNorm1d default eps
_NEG_INF = -1e30     # pad-class logit sentinel
_LANE = 128


def _round_up(n, m):
    return ((n + m - 1) // m) * m


def _bn_fused(h, gamma, beta, inv_b):
    """Training-mode batch norm with fused single-pass statistics:
    var = E[h^2] - E[h]^2, scale = gamma * rsqrt(var + eps)."""
    s1 = jnp.sum(h, axis=0, keepdims=True)
    s2 = jnp.sum(h * h, axis=0, keepdims=True)
    mean = s1 * inv_b
    var = s2 * inv_b - mean * mean
    scale = gamma * jax.lax.rsqrt(var + _EPS)
    return (h - mean) * scale + beta


def classifier_kernel(x_ref, w_ref, v_ref, out_ref, *, use_bn, batch, compute_dtype):
    """x_ref: (B, P) f32; w_ref: (4, P, P) compute_dtype; v_ref: (16, P) f32.
    Vector-table rows: [b1, g1, be1, b2, g2, be2, b3, g3, be3, b4, ...pad]."""
    inv_b = jnp.float32(1.0 / batch)
    h = x_ref[...]

    # Three (Linear -> BN -> ReLU) blocks.  All slices below are static -> free.
    for layer in range(3):
        w = w_ref[layer]                                   # (P, P)
        b = v_ref[3 * layer + 0:3 * layer + 1, :]          # (1, P)
        g = v_ref[3 * layer + 1:3 * layer + 2, :]
        be = v_ref[3 * layer + 2:3 * layer + 3, :]
        h = jnp.dot(h.astype(compute_dtype), w,
                    preferred_element_type=jnp.float32) + b
        if use_bn:
            h = _bn_fused(h, g, be, inv_b)
        h = jnp.maximum(h, 0.0)

    # Final Linear.  Pad lanes of b4 are -1e30, so pad columns act like -inf
    # logits and drop out of the log-softmax.
    logits = jnp.dot(h.astype(compute_dtype), w_ref[3],
                     preferred_element_type=jnp.float32) + v_ref[9:10, :]

    # LogSoftmax(dim=1), numerically stable, lane-dense store.
    m = jnp.max(logits, axis=1, keepdims=True)
    shifted = logits - m
    lse = jnp.log(jnp.sum(jnp.exp(shifted), axis=1, keepdims=True))
    out_ref[...] = shifted - lse


def pack_params(params, compute_dtype=jnp.bfloat16):
    """Host-side, one-time packing: pad every feature dim to a common lane-dense
    P and consolidate weights / vectors into two buffers."""
    dims = [params["w1"].shape[0]] + [params[f"w{i}"].shape[1] for i in (1, 2, 3, 4)]
    P = _round_up(max(dims), _LANE)
    num_classes = dims[-1]

    w = jnp.zeros((4, P, P), compute_dtype)
    for i in range(4):
        wi = params[f"w{i + 1}"].astype(compute_dtype)
        w = w.at[i, :wi.shape[0], :wi.shape[1]].set(wi)

    vecs = jnp.zeros((16, P), jnp.float32)
    rows = [
        (0, params["b1"]), (1, params["g1"]), (2, params["be1"]),
        (3, params["b2"]), (4, params["g2"]), (5, params["be2"]),
        (6, params["b3"]), (7, params["g3"]), (8, params["be3"]),
    ]
    for r, v in rows:
        v = v.reshape(-1)
        vecs = vecs.at[r, :v.shape[0]].set(v.astype(jnp.float32))
    b4_row = jnp.full((P,), _NEG_INF, jnp.float32).at[:num_classes].set(
        params["b4"].reshape(-1).astype(jnp.float32))
    vecs = vecs.at[9, :].set(b4_row)

    return dict(w=w, vecs=vecs, padded_dim=P, num_classes=num_classes,
                input_size=dims[0], compute_dtype=compute_dtype)


def classifier_forward(x, packed):
    """Single-block Pallas call: whole batch + all params resident in VMEM."""
    B, in_f = x.shape
    P = packed["padded_dim"]
    C = packed["num_classes"]
    use_bn = B > 1  # mirrors the `if x.size(0) > 1` guard in the PyTorch module

    x_pad = jnp.zeros((B, P), jnp.float32).at[:, :in_f].set(x.astype(jnp.float32))
    w, vecs = packed["w"], packed["vecs"]

    flops = 2 * B * P * P * 4 + 10 * B * P
    transcendentals = B * P + B + 3 * P
    bytes_accessed = (x_pad.size * 4 + w.size * jnp.dtype(w.dtype).itemsize
                      + vecs.size * 4 + B * P * 4)

    vmem = pl.BlockSpec(memory_space=pltpu.MemorySpace.VMEM)
    out = pl.pallas_call(
        functools.partial(classifier_kernel, use_bn=use_bn, batch=B,
                          compute_dtype=packed["compute_dtype"]),
        out_shape=jax.ShapeDtypeStruct((B, P), jnp.float32),
        in_specs=[vmem, vmem, vmem],
        out_specs=vmem,
        cost_estimate=pl.CostEstimate(flops=int(flops),
                                      transcendentals=int(transcendentals),
                                      bytes_accessed=int(bytes_accessed)),
    )(x_pad, w, vecs)
    return out[:, :C]


def init_params(key, input_size, h1, h2, h3, num_classes):
    """Deterministic init mimicking nn.Linear default (uniform +/- 1/sqrt(fan_in));
    BatchNorm gamma=1, beta=0."""
    def linear(k, fan_in, fan_out):
        kw, kb = jax.random.split(k)
        bound = 1.0 / float(fan_in) ** 0.5
        w = jax.random.uniform(kw, (fan_in, fan_out), jnp.float32, -bound, bound)
        b = jax.random.uniform(kb, (1, fan_out), jnp.float32, -bound, bound)
        return w, b

    k1, k2, k3, k4 = jax.random.split(key, 4)
    w1, b1 = linear(k1, input_size, h1)
    w2, b2 = linear(k2, h1, h2)
    w3, b3 = linear(k3, h2, h3)
    w4, b4 = linear(k4, h3, num_classes)
    return dict(
        w1=w1, b1=b1, g1=jnp.ones((1, h1), jnp.float32), be1=jnp.zeros((1, h1), jnp.float32),
        w2=w2, b2=b2, g2=jnp.ones((1, h2), jnp.float32), be2=jnp.zeros((1, h2), jnp.float32),
        w3=w3, b3=b3, g3=jnp.ones((1, h3), jnp.float32), be3=jnp.zeros((1, h3), jnp.float32),
        w4=w4, b4=b4,
    )


def classifier_reference(x, params, use_bn, compute_dtype=jnp.bfloat16):
    """Pure-JAX reference (same bf16-operand matmul / fused-BN math, unpadded)."""
    inv_b = jnp.float32(1.0 / x.shape[0])

    def dot(a, w):
        return jnp.dot(a.astype(compute_dtype), w.astype(compute_dtype),
                       preferred_element_type=jnp.float32)

    h = dot(x, params["w1"]) + params["b1"]
    if use_bn:
        h = _bn_fused(h, params["g1"], params["be1"], inv_b)
    h = jnp.maximum(h, 0.0)
    h = dot(h, params["w2"]) + params["b2"]
    if use_bn:
        h = _bn_fused(h, params["g2"], params["be2"], inv_b)
    h = jnp.maximum(h, 0.0)
    h = dot(h, params["w3"]) + params["b3"]
    if use_bn:
        h = _bn_fused(h, params["g3"], params["be3"], inv_b)
    h = jnp.maximum(h, 0.0)
    logits = dot(h, params["w4"]) + params["b4"]
    return jax.nn.log_softmax(logits, axis=1)


if __name__ == "__main__":
    # Small shapes consistent with the module's forward.
    B, INPUT, H1, H2, H3, NUM_CLASSES = 8, 32, 64, 48, 32, 10

    key = jax.random.PRNGKey(0)
    kx, kp = jax.random.split(key)
    x = jax.random.normal(kx, (B, INPUT), jnp.float32)
    params = init_params(kp, INPUT, H1, H2, H3, NUM_CLASSES)

    packed = pack_params(params, compute_dtype=jnp.bfloat16)
    out = classifier_forward(x, packed)
    out = jax.block_until_ready(out)

    ref = classifier_reference(x, params, use_bn=(B > 1))
    assert out.shape == (B, NUM_CLASSES)
    assert bool(jnp.all(jnp.isfinite(out))), "non-finite output"
    assert jnp.allclose(out, ref, atol=2e-3, rtol=2e-3), "mismatch vs reference"
    # TODO(synk): `return_features=True` path (returning (logits, features)) is not
    # exposed; only the default log_softmax output is implemented.
    print("KERNEL_OK")
</pallas_src>

<mosaic_0001>
module attributes {stable_mosaic.version = 11 : i64} {
  func.func @classifier_kernel(%arg0: memref<8x128xf32, #tpu.memory_space<vmem>>, %arg1: memref<4x128x128xbf16, #tpu.memory_space<vmem>>, %arg2: memref<16x128xf32, #tpu.memory_space<vmem>>, %arg3: memref<8x128xf32, #tpu.memory_space<vmem>>) attributes {dimension_semantics = [], scalar_prefetch = 0 : i64, scratch_operands = 0 : i64, tpu.core_type = #tpu.core_type<tc>} {
    %c0 = arith.constant 0 : index
    %c0_0 = arith.constant 0 : index
    %0 = vector.load %arg0[%c0, %c0_0] : memref<8x128xf32, #tpu.memory_space<vmem>>, vector<8x128xf32>
    %c0_1 = arith.constant 0 : index
    %c0_2 = arith.constant 0 : index
    %c0_3 = arith.constant 0 : index
    %1 = vector.load %arg1[%c0_1, %c0_2, %c0_3] : memref<4x128x128xbf16, #tpu.memory_space<vmem>>, vector<1x128x128xbf16>
    %2 = vector.shape_cast %1 : vector<1x128x128xbf16> to vector<128x128xbf16>
    %c0_4 = arith.constant 0 : index
    %c0_5 = arith.constant 0 : index
    %3 = vector.load %arg2[%c0_4, %c0_5] : memref<16x128xf32, #tpu.memory_space<vmem>>, vector<1x128xf32>
    %c1 = arith.constant 1 : index
    %c0_6 = arith.constant 0 : index
    %4 = vector.load %arg2[%c1, %c0_6] : memref<16x128xf32, #tpu.memory_space<vmem>>, vector<1x128xf32>
    %c2 = arith.constant 2 : index
    %c0_7 = arith.constant 0 : index
    %5 = vector.load %arg2[%c2, %c0_7] : memref<16x128xf32, #tpu.memory_space<vmem>>, vector<1x128xf32>
    %6 = arith.truncf %0 : vector<8x128xf32> to vector<8x128xbf16>
    %cst = arith.constant dense<0.000000e+00> : vector<8x128xf32>
    %7 = tpu.matmul %6, %2, %cst {dimension_numbers = #tpu.dot_dimension_numbers<[1], [0], [0], [1], [0, 0, 1, 1], [], []>} : vector<8x128xbf16>, vector<128x128xbf16>, vector<8x128xf32> -> vector<8x128xf32>
    %8 = vector.broadcast %3 : vector<1x128xf32> to vector<8x128xf32>
    %9 = arith.addf %7, %8 : vector<8x128xf32>
    %cst_8 = arith.constant dense<0.000000e+00> : vector<128xf32>
    %10 = vector.multi_reduction <add>, %9, %cst_8 [0] : vector<8x128xf32> to vector<128xf32>
    %11 = vector.shape_cast %10 : vector<128xf32> to vector<1x128xf32>
    %12 = arith.mulf %9, %9 : vector<8x128xf32>
    %cst_9 = arith.constant dense<0.000000e+00> : vector<128xf32>
    %13 = vector.multi_reduction <add>, %12, %cst_9 [0] : vector<8x128xf32> to vector<128xf32>
    %14 = vector.shape_cast %13 : vector<128xf32> to vector<1x128xf32>
    %cst_10 = arith.constant 1.250000e-01 : f32
    %15 = vector.broadcast %cst_10 : f32 to vector<1x128xf32>
    %16 = arith.mulf %11, %15 : vector<1x128xf32>
    %cst_11 = arith.constant 1.250000e-01 : f32
    %17 = vector.broadcast %cst_11 : f32 to vector<1x128xf32>
    %18 = arith.mulf %14, %17 : vector<1x128xf32>
    %19 = arith.mulf %16, %16 : vector<1x128xf32>
    %20 = arith.subf %18, %19 : vector<1x128xf32>
    %cst_12 = arith.constant 9.99999974E-6 : f32
    %21 = vector.broadcast %cst_12 : f32 to vector<1x128xf32>
    %22 = arith.addf %20, %21 : vector<1x128xf32>
    %23 = math.rsqrt %22 : vector<1x128xf32>
    %24 = arith.mulf %4, %23 : vector<1x128xf32>
    %25 = vector.broadcast %16 : vector<1x128xf32> to vector<8x128xf32>
    %26 = arith.subf %9, %25 : vector<8x128xf32>
    %27 = vector.broadcast %24 : vector<1x128xf32> to vector<8x128xf32>
    %28 = arith.mulf %26, %27 : vector<8x128xf32>
    %29 = vector.broadcast %5 : vector<1x128xf32> to vector<8x128xf32>
    %30 = arith.addf %28, %29 : vector<8x128xf32>
    %cst_13 = arith.constant 0.000000e+00 : f32
    %31 = vector.broadcast %cst_13 : f32 to vector<8x128xf32>
    %32 = arith.maximumf %30, %31 : vector<8x128xf32>
    %c1_14 = arith.constant 1 : index
    %c0_15 = arith.constant 0 : index
    %c0_16 = arith.constant 0 : index
    %33 = vector.load %arg1[%c1_14, %c0_15, %c0_16] : memref<4x128x128xbf16, #tpu.memory_space<vmem>>, vector<1x128x128xbf16>
    %34 = vector.shape_cast %33 : vector<1x128x128xbf16> to vector<128x128xbf16>
    %c3 = arith.constant 3 : index
    %c0_17 = arith.constant 0 : index
    %35 = vector.load %arg2[%c3, %c0_17] : memref<16x128xf32, #tpu.memory_space<vmem>>, vector<1x128xf32>
    %c4 = arith.constant 4 : index
    %c0_18 = arith.constant 0 : index
    %36 = vector.load %arg2[%c4, %c0_18] : memref<16x128xf32, #tpu.memory_space<vmem>>, vector<1x128xf32>
    %c5 = arith.constant 5 : index
    %c0_19 = arith.constant 0 : index
    %37 = vector.load %arg2[%c5, %c0_19] : memref<16x128xf32, #tpu.memory_space<vmem>>, vector<1x128xf32>
    %38 = arith.truncf %32 : vector<8x128xf32> to vector<8x128xbf16>
    %cst_20 = arith.constant dense<0.000000e+00> : vector<8x128xf32>
    %39 = tpu.matmul %38, %34, %cst_20 {dimension_numbers = #tpu.dot_dimension_numbers<[1], [0], [0], [1], [0, 0, 1, 1], [], []>} : vector<8x128xbf16>, vector<128x128xbf16>, vector<8x128xf32> -> vector<8x128xf32>
    %40 = vector.broadcast %35 : vector<1x128xf32> to vector<8x128xf32>
    %41 = arith.addf %39, %40 : vector<8x128xf32>
    %cst_21 = arith.constant dense<0.000000e+00> : vector<128xf32>
    %42 = vector.multi_reduction <add>, %41, %cst_21 [0] : vector<8x128xf32> to vector<128xf32>
    %43 = vector.shape_cast %42 : vector<128xf32> to vector<1x128xf32>
    %44 = arith.mulf %41, %41 : vector<8x128xf32>
    %cst_22 = arith.constant dense<0.000000e+00> : vector<128xf32>
    %45 = vector.multi_reduction <add>, %44, %cst_22 [0] : vector<8x128xf32> to vector<128xf32>
    %46 = vector.shape_cast %45 : vector<128xf32> to vector<1x128xf32>
    %cst_23 = arith.constant 1.250000e-01 : f32
    %47 = vector.broadcast %cst_23 : f32 to vector<1x128xf32>
    %48 = arith.mulf %43, %47 : vector<1x128xf32>
    %cst_24 = arith.constant 1.250000e-01 : f32
    %49 = vector.broadcast %cst_24 : f32 to vector<1x128xf32>
    %50 = arith.mulf %46, %49 : vector<1x128xf32>
    %51 = arith.mulf %48, %48 : vector<1x128xf32>
    %52 = arith.subf %50, %51 : vector<1x128xf32>
    %cst_25 = arith.constant 9.99999974E-6 : f32
    %53 = vector.broadcast %cst_25 : f32 to vector<1x128xf32>
    %54 = arith.addf %52, %53 : vector<1x128xf32>
    %55 = math.rsqrt %54 : vector<1x128xf32>
    %56 = arith.mulf %36, %55 : vector<1x128xf32>
    %57 = vector.broadcast %48 : vector<1x128xf32> to vector<8x128xf32>
    %58 = arith.subf %41, %57 : vector<8x128xf32>
    %59 = vector.broadcast %56 : vector<1x128xf32> to vector<8x128xf32>
    %60 = arith.mulf %58, %59 : vector<8x128xf32>
    %61 = vector.broadcast %37 : vector<1x128xf32> to vector<8x128xf32>
    %62 = arith.addf %60, %61 : vector<8x128xf32>
    %cst_26 = arith.constant 0.000000e+00 : f32
    %63 = vector.broadcast %cst_26 : f32 to vector<8x128xf32>
    %64 = arith.maximumf %62, %63 : vector<8x128xf32>
    %c2_27 = arith.constant 2 : index
    %c0_28 = arith.constant 0 : index
    %c0_29 = arith.constant 0 : index
    %65 = vector.load %arg1[%c2_27, %c0_28, %c0_29] : memref<4x128x128xbf16, #tpu.memory_space<vmem>>, vector<1x128x128xbf16>
    %66 = vector.shape_cast %65 : vector<1x128x128xbf16> to vector<128x128xbf16>
    %c6 = arith.constant 6 : index
    %c0_30 = arith.constant 0 : index
    %67 = vector.load %arg2[%c6, %c0_30] : memref<16x128xf32, #tpu.memory_space<vmem>>, vector<1x128xf32>
    %c7 = arith.constant 7 : index
    %c0_31 = arith.constant 0 : index
    %68 = vector.load %arg2[%c7, %c0_31] : memref<16x128xf32, #tpu.memory_space<vmem>>, vector<1x128xf32>
    %c8 = arith.constant 8 : index
    %c0_32 = arith.constant 0 : index
    %69 = vector.load %arg2[%c8, %c0_32] : memref<16x128xf32, #tpu.memory_space<vmem>>, vector<1x128xf32>
    %70 = arith.truncf %64 : vector<8x128xf32> to vector<8x128xbf16>
    %cst_33 = arith.constant dense<0.000000e+00> : vector<8x128xf32>
    %71 = tpu.matmul %70, %66, %cst_33 {dimension_numbers = #tpu.dot_dimension_numbers<[1], [0], [0], [1], [0, 0, 1, 1], [], []>} : vector<8x128xbf16>, vector<128x128xbf16>, vector<8x128xf32> -> vector<8x128xf32>
    %72 = vector.broadcast %67 : vector<1x128xf32> to vector<8x128xf32>
    %73 = arith.addf %71, %72 : vector<8x128xf32>
    %cst_34 = arith.constant dense<0.000000e+00> : vector<128xf32>
    %74 = vector.multi_reduction <add>, %73, %cst_34 [0] : vector<8x128xf32> to vector<128xf32>
    %75 = vector.shape_cast %74 : vector<128xf32> to vector<1x128xf32>
    %76 = arith.mulf %73, %73 : vector<8x128xf32>
    %cst_35 = arith.constant dense<0.000000e+00> : vector<128xf32>
    %77 = vector.multi_reduction <add>, %76, %cst_35 [0] : vector<8x128xf32> to vector<128xf32>
    %78 = vector.shape_cast %77 : vector<128xf32> to vector<1x128xf32>
    %cst_36 = arith.constant 1.250000e-01 : f32
    %79 = vector.broadcast %cst_36 : f32 to vector<1x128xf32>
    %80 = arith.mulf %75, %79 : vector<1x128xf32>
    %cst_37 = arith.constant 1.250000e-01 : f32
    %81 = vector.broadcast %cst_37 : f32 to vector<1x128xf32>
    %82 = arith.mulf %78, %81 : vector<1x128xf32>
    %83 = arith.mulf %80, %80 : vector<1x128xf32>
    %84 = arith.subf %82, %83 : vector<1x128xf32>
    %cst_38 = arith.constant 9.99999974E-6 : f32
    %85 = vector.broadcast %cst_38 : f32 to vector<1x128xf32>
    %86 = arith.addf %84, %85 : vector<1x128xf32>
    %87 = math.rsqrt %86 : vector<1x128xf32>
    %88 = arith.mulf %68, %87 : vector<1x128xf32>
    %89 = vector.broadcast %80 : vector<1x128xf32> to vector<8x128xf32>
    %90 = arith.subf %73, %89 : vector<8x128xf32>
    %91 = vector.broadcast %88 : vector<1x128xf32> to vector<8x128xf32>
    %92 = arith.mulf %90, %91 : vector<8x128xf32>
    %93 = vector.broadcast %69 : vector<1x128xf32> to vector<8x128xf32>
    %94 = arith.addf %92, %93 : vector<8x128xf32>
    %cst_39 = arith.constant 0.000000e+00 : f32
    %95 = vector.broadcast %cst_39 : f32 to vector<8x128xf32>
    %96 = arith.maximumf %94, %95 : vector<8x128xf32>
    %97 = arith.truncf %96 : vector<8x128xf32> to vector<8x128xbf16>
    %c3_40 = arith.constant 3 : index
    %c0_41 = arith.constant 0 : index
    %c0_42 = arith.constant 0 : index
    %98 = vector.load %arg1[%c3_40, %c0_41, %c0_42] : memref<4x128x128xbf16, #tpu.memory_space<vmem>>, vector<1x128x128xbf16>
    %99 = vector.shape_cast %98 : vector<1x128x128xbf16> to vector<128x128xbf16>
    %cst_43 = arith.constant dense<0.000000e+00> : vector<8x128xf32>
    %100 = tpu.matmul %97, %99, %cst_43 {dimension_numbers = #tpu.dot_dimension_numbers<[1], [0], [0], [1], [0, 0, 1, 1], [], []>} : vector<8x128xbf16>, vector<128x128xbf16>, vector<8x128xf32> -> vector<8x128xf32>
    %c9 = arith.constant 9 : index
    %c0_44 = arith.constant 0 : index
    %101 = vector.load %arg2[%c9, %c0_44] : memref<16x128xf32, #tpu.memory_space<vmem>>, vector<1x128xf32>
    %102 = vector.broadcast %101 : vector<1x128xf32> to vector<8x128xf32>
    %103 = arith.addf %100, %102 : vector<8x128xf32>
    %cst_45 = arith.constant dense<0xFF800000> : vector<8xf32>
    %104 = vector.multi_reduction <maximumf>, %103, %cst_45 [1] : vector<8x128xf32> to vector<8xf32>
    %105 = vector.shape_cast %104 : vector<8xf32> to vector<8x1xf32>
    %106 = vector.broadcast %105 : vector<8x1xf32> to vector<8x128xf32>
    %107 = arith.subf %103, %106 : vector<8x128xf32>
    %108 = math.exp %107 : vector<8x128xf32>
    %cst_46 = arith.constant dense<0.000000e+00> : vector<8xf32>
    %109 = vector.multi_reduction <add>, %108, %cst_46 [1] : vector<8x128xf32> to vector<8xf32>
    %110 = vector.shape_cast %109 : vector<8xf32> to vector<8x1xf32>
    %111 = math.log %110 : vector<8x1xf32>
    %112 = vector.broadcast %111 : vector<8x1xf32> to vector<8x128xf32>
    %113 = arith.subf %107, %112 : vector<8x128xf32>
    %c0_47 = arith.constant 0 : index
    %c0_48 = arith.constant 0 : index
    %114 = vector.load %arg3[%c0_47, %c0_48] : memref<8x128xf32, #tpu.memory_space<vmem>>, vector<8x128xf32>
    tpu.vector_store %arg3[%c0_47, %c0_48], %113 {strides = array<i32>} : memref<8x128xf32, #tpu.memory_space<vmem>>, vector<8x128xf32>,
    return
  }
}

</mosaic_0001>

<llo_original>
// kernel: tpu_custom_call.1
$region0: #{tpu_custom_call.1}
  #allocation0 [shape = 'u32[]', space=smem, size = 0x4, offset = 0x4, fixed_abs, tag = 'smem constant byte address 0x4 - core index']
  #allocation1 [shape = 'u32[72,128]{1,0:T(1,128)}', space=vmem, size = 0x9000, scoped, tag = 'internal scratch']
  %s0 = inlined_call_operand.hbm [shape: f32[8,128], index: 0, kind: input, shape index: {}]
  %s1 = inlined_call_operand.hbm [shape: bf16[4,128,128], index: 1, kind: input, shape index: {}]
  %s2 = inlined_call_operand.hbm [shape: f32[16,128], index: 2, kind: input, shape index: {}]
  %s3 = inlined_call_operand.hbm [shape: f32[8,128], index: 3, kind: output, shape index: {}]
  %s4 = sld [smem:[#allocation0]]
  $region34: #{tpu_custom_call.1} parent=0
    _
  %s6 = ssub.s32 1, %s4
  %s7 = scalar_select 0, %s6, %s4
  $region1: #{tpu_custom_call.1} parent=0
    #allocation2 [shape = 'u8[4096]{0}', space=vmem, size = 0x1000, scoped, tag = 'input window, operand 0, single buffered']
    #allocation3 [shape = 's32[1]{0}', space=sflag, size = 0x4, scoped, tag = 'scoped memory for tpu_custom_call.1']
    #allocation4 [shape = 's32[1]{0}', space=sflag, size = 0x4, scoped, tag = 'scoped memory for tpu_custom_call.1']
    #allocation5 [shape = 'u8[131072]{0}', space=vmem, size = 0x20000, scoped, tag = 'input window, operand 1, single buffered']
    #allocation6 [shape = 's32[1]{0}', space=sflag, size = 0x4, scoped, tag = 'scoped memory for tpu_custom_call.1']
    #allocation7 [shape = 'u8[8192]{0}', space=vmem, size = 0x2000, scoped, tag = 'input window, operand 2, single buffered']
    #allocation8 [shape = 'u8[4096]{0}', space=vmem, size = 0x1000, scoped, tag = 'output window, operand 0, single buffered']
    %8 = vsyncpa [#allocation3], 0
    %9 = vsyncpa [#allocation6], 0
    %10 = vsyncpa [#allocation4], 0
    // Predicated region
    $region2: #{tpu_custom_call.1} parent=1 // pred_check
      _
    $region3: #{tpu_custom_call.1} parent=1 // pred_check_branch
      %12 = sbr.rel (0) target = $region5
    $region4: #{tpu_custom_call.1} parent=1 // pred_region
      %14 = vsyncadd [#allocation3], 0
      %s16 = sshll.u32 %s0, 4
      %s17 = int_to_ptr.hbm [resolvable:$true] %s16
      %s18 = sshll.u32 [#allocation2], 4
      %s19 = int_to_ptr.vmem [resolvable:$true] %s18
      %21 = dma.hbm_to_vmem [thread:$0]  %s17, 128, %s19, [#allocation3]
    $region5: #{tpu_custom_call.1} parent=1 // pred_fallthru
      _
    // Predicated region
    $region6: #{tpu_custom_call.1} parent=1 // pred_check
      _
    $region7: #{tpu_custom_call.1} parent=1 // pred_check_branch
      %23 = sbr.rel (0) target = $region9
    $region8: #{tpu_custom_call.1} parent=1 // pred_region
      %25 = vsyncadd [#allocation6], 0
      %s26 = sshll.u32 %s1, 4
      %s27 = int_to_ptr.hbm [resolvable:$true] %s26
      %s28 = sshll.u32 [#allocation5], 4
      %s29 = int_to_ptr.vmem [resolvable:$true] %s28
      %34 = dma.hbm_to_vmem [thread:$0]  %s27, 4096, %s29, [#allocation6], 64, 64, 4
    $region9: #{tpu_custom_call.1} parent=1 // pred_fallthru
      _
    // Predicated region
    $region10: #{tpu_custom_call.1} parent=1 // pred_check
      _
    $region11: #{tpu_custom_call.1} parent=1 // pred_check_branch
      %36 = sbr.rel (0) target = $region13
    $region12: #{tpu_custom_call.1} parent=1 // pred_region
      %38 = vsyncadd [#allocation6], 0
      %s39 = sshll.u32 %s2, 4
      %s40 = int_to_ptr.hbm [resolvable:$true] %s39
      %s41 = sshll.u32 [#allocation7], 4
      %s42 = int_to_ptr.vmem [resolvable:$true] %s41
      %47 = dma.hbm_to_vmem [thread:$0]  %s40, 256, %s42, [#allocation6], 128, 128, 8
    $region13: #{tpu_custom_call.1} parent=1 // pred_fallthru
      _
    // Predicated region
    $region14: #{tpu_custom_call.1} parent=1 // pred_check
      _
    $region15: #{tpu_custom_call.1} parent=1 // pred_check_branch
      %49 = sbr.rel (0) target = $region17
    $region16: #{tpu_custom_call.1} parent=1 // pred_region
      %51 = dma.done [#allocation3], 128
    $region17: #{tpu_custom_call.1} parent=1 // pred_fallthru
      _
    // Predicated region
    $region18: #{tpu_custom_call.1} parent=1 // pred_check
      _
    $region19: #{tpu_custom_call.1} parent=1 // pred_check_branch
      %53 = sbr.rel (0) target = $region21
    $region20: #{tpu_custom_call.1} parent=1 // pred_region
      %55 = dma.done [#allocation6], 4096
    $region21: #{tpu_custom_call.1} parent=1 // pred_fallthru
      _
    // Predicated region
    $region22: #{tpu_custom_call.1} parent=1 // pred_check
      _
    $region23: #{tpu_custom_call.1} parent=1 // pred_check_branch
      %57 = sbr.rel (0) target = $region25
    $region24: #{tpu_custom_call.1} parent=1 // pred_region
      %59 = dma.done [#allocation6], 256
    $region25: #{tpu_custom_call.1} parent=1 // pred_fallthru
      _
    %v60 = vld [vmem:[#allocation2] sm:$0xff]
    %v61 = vld [vmem:[#allocation5] sm:$0xf]
    %v62 = vld [vmem:[#allocation5 + $0x4] sm:$0xf]
    %v63 = vld [vmem:[#allocation5 + $0x8] sm:$0xf]
    %v64 = vld [vmem:[#allocation5 + $0xc] sm:$0xf]
    %v65 = vld [vmem:[#allocation5 + $0x10] sm:$0xf]
    %v66 = vld [vmem:[#allocation5 + $0x14] sm:$0xf]
    %v67 = vld [vmem:[#allocation5 + $0x18] sm:$0xf]
    %v68 = vld [vmem:[#allocation5 + $0x1c] sm:$0xf]
    %v69 = vld [vmem:[#allocation5 + $0x20] sm:$0xf]
    %v70 = vld [vmem:[#allocation5 + $0x24] sm:$0xf]
    %v71 = vld [vmem:[#allocation5 + $0x28] sm:$0xf]
    %v72 = vld [vmem:[#allocation5 + $0x2c] sm:$0xf]
    %v73 = vld [vmem:[#allocation5 + $0x30] sm:$0xf]
    %v74 = vld [vmem:[#allocation5 + $0x34] sm:$0xf]
    %v75 = vld [vmem:[#allocation5 + $0x38] sm:$0xf]
    %v76 = vld [vmem:[#allocation5 + $0x3c] sm:$0xf]
    %v77 = vld [vmem:[#allocation7] sm:$0x1]
    %v78 = vld [vmem:[#allocation7 + $0x1] sm:$0x1]
    %v79 = vld [vmem:[#allocation7 + $0x2] sm:$0x1]
    %v80 = vpack.c.bf16 %v60, %v60
    %v81 = vperm.slane %v77, 0
    %v98 = vunpack.c.l.b16 %v61
    %v99 = vunpack.c.l.b16 %v62
    %v100 = vunpack.c.l.b16 %v63
    %v101 = vunpack.c.l.b16 %v64
    %v102 = vunpack.c.l.b16 %v65
    %v103 = vunpack.c.l.b16 %v66
    %v104 = vunpack.c.l.b16 %v67
    %v105 = vunpack.c.l.b16 %v68
    %v106 = vunpack.c.l.b16 %v69
    %v107 = vunpack.c.l.b16 %v70
    %v108 = vunpack.c.l.b16 %v71
    %v109 = vunpack.c.l.b16 %v72
    %v110 = vunpack.c.l.b16 %v73
    %v111 = vunpack.c.l.b16 %v74
    %v112 = vunpack.c.l.b16 %v75
    %v113 = vunpack.c.l.b16 %v76
    %v114 = vpack.c.b16 %v99, %v98
    %v115 = vpack.c.b16 %v101, %v100
    %v116 = vpack.c.b16 %v103, %v102
    %v117 = vpack.c.b16 %v105, %v104
    %v118 = vpack.c.b16 %v107, %v106
    %v119 = vpack.c.b16 %v109, %v108
    %v120 = vpack.c.b16 %v111, %v110
    %v121 = vpack.c.b16 %v113, %v112
    %130 = vmatpush.bf16.msra.mxu0 %v121
    %131 = vmatpush.bf16.msra.mxu0 %v120
    %132 = vmatpush.bf16.msra.mxu0 %v119
    %133 = vmatpush.bf16.msra.mxu0 %v118
    %134 = vmatpush.bf16.msra.mxu0 %v117
    %135 = vmatpush.bf16.msra.mxu0 %v116
    %136 = vmatpush.bf16.msra.mxu0 %v115
    %137 = vmatpush.bf16.msra.mxu0 %v114
    %138 = vmatmul.bf16.gmra.mxu0 %v80
    %v139 = vpop.f32.mrf.mxu0
    %v140 = vadd.f32 %v81, %v139
    %v141 = vpop.f32.mrf.mxu0
    %142 = vdwg.mxu0
    %v143 = vrot.slane %v140, 4
    %v144 = vadd.f32 %v140, %v143
    %v145 = vrot.slane %v144, 2
    %v146 = vadd.f32 %v144, %v145
    %v147 = vrot.slane %v146, 1
    %v148 = vadd.f32 %v146, %v147
    %v149 = vmul.f32 %v140, %v140
    %v150 = vrot.slane %v149, 4
    %v151 = vadd.f32 %v149, %v150
    %v152 = vrot.slane %v151, 2
    %v153 = vadd.f32 %v151, %v152
    %v154 = vrot.slane %v153, 1
    %v155 = vadd.f32 %v153, %v154
    %v156 = vmul.f32 %v148, 0.125
    %v157 = vmul.f32 %v155, 0.125
    %v158 = vmul.f32 %v156, %v156
    %v159 = vsub.f32 %v157, %v158
    %v160 = vadd.f32 %v159, 1e-05
    %v161 = vrsqrt.pop %v160
    %v162 = vmul.f32 %v161, %v160
    %v163 = vmul.f32 %v162, %v161
    %v164 = vmul.f32 0.5, %v163
    %v165 = vsub.f32 1.5, %v164
    %v166 = vmul.f32 %v161, %v165
    %vm167 = vweird.f32 %v160
    %vm168 = vweird.f32 %v161
    %vm169 = vmor %vm167, %vm168
    %v170 = vsel %vm169, %v161, %v166
    %v171 = vmul.f32 %v78, %v170
    %v172 = vsub.f32 %v140, %v156
    %v173 = vperm.slane %v171, 0
    %v174 = vmul.f32 %v172, %v173
    %v175 = vperm.slane %v79, 0
    %v176 = vadd.f32 %v174, %v175
    %v177 = vmax.f32 %v176, 0.0
    %s178 = scalar_lea.vmem [#allocation5], 64
    %v179 = vld [vmem:[%s178] sm:$0xf]
    %v180 = vld [vmem:[%s178 + $0x4] sm:$0xf]
    %v181 = vld [vmem:[%s178 + $0x8] sm:$0xf]
    %v182 = vld [vmem:[%s178 + $0xc] sm:$0xf]
    %v183 = vld [vmem:[%s178 + $0x10] sm:$0xf]
    %v184 = vld [vmem:[%s178 + $0x14] sm:$0xf]
    %v185 = vld [vmem:[%s178 + $0x18] sm:$0xf]
    %v186 = vld [vmem:[%s178 + $0x1c] sm:$0xf]
    %v187 = vld [vmem:[%s178 + $0x20] sm:$0xf]
    %v188 = vld [vmem:[%s178 + $0x24] sm:$0xf]
    %v189 = vld [vmem:[%s178 + $0x28] sm:$0xf]
    %v190 = vld [vmem:[%s178 + $0x2c] sm:$0xf]
    %v191 = vld [vmem:[%s178 + $0x30] sm:$0xf]
    %v192 = vld [vmem:[%s178 + $0x34] sm:$0xf]
    %v193 = vld [vmem:[%s178 + $0x38] sm:$0xf]
    %v194 = vld [vmem:[%s178 + $0x3c] sm:$0xf]
    %v195 = vld [vmem:[#allocation7 + $0x3] sm:$0x1]
    %v196 = vld [vmem:[#allocation7 + $0x4] sm:$0x1]
    %v197 = vld [vmem:[#allocation7 + $0x5] sm:$0x1]
    %v198 = vpack.c.bf16 %v177, %v177
    %v199 = vperm.slane %v195, 0
    %v216 = vunpack.c.l.b16 %v179
    %v217 = vunpack.c.l.b16 %v180
    %v218 = vunpack.c.l.b16 %v181
    %v219 = vunpack.c.l.b16 %v182
    %v220 = vunpack.c.l.b16 %v183
    %v221 = vunpack.c.l.b16 %v184
    %v222 = vunpack.c.l.b16 %v185
    %v223 = vunpack.c.l.b16 %v186
    %v224 = vunpack.c.l.b16 %v187
    %v225 = vunpack.c.l.b16 %v188
    %v226 = vunpack.c.l.b16 %v189
    %v227 = vunpack.c.l.b16 %v190
    %v228 = vunpack.c.l.b16 %v191
    %v229 = vunpack.c.l.b16 %v192
    %v230 = vunpack.c.l.b16 %v193
    %v231 = vunpack.c.l.b16 %v194
    %v232 = vpack.c.b16 %v217, %v216
    %v233 = vpack.c.b16 %v219, %v218
    %v234 = vpack.c.b16 %v221, %v220
    %v235 = vpack.c.b16 %v223, %v222
    %v236 = vpack.c.b16 %v225, %v224
    %v237 = vpack.c.b16 %v227, %v226
    %v238 = vpack.c.b16 %v229, %v228
    %v239 = vpack.c.b16 %v231, %v230
    %248 = vmatpush.bf16.msra.mxu0 %v239
    %249 = vmatpush.bf16.msra.mxu0 %v238
    %250 = vmatpush.bf16.msra.mxu0 %v237
    %251 = vmatpush.bf16.msra.mxu0 %v236
    %252 = vmatpush.bf16.msra.mxu0 %v235
    %253 = vmatpush.bf16.msra.mxu0 %v234
    %254 = vmatpush.bf16.msra.mxu0 %v233
    %255 = vmatpush.bf16.msra.mxu0 %v232
    %256 = vmatmul.bf16.gmra.mxu0 %v198
    %v257 = vpop.f32.mrf.mxu0
    %v258 = vadd.f32 %v199, %v257
    %v259 = vpop.f32.mrf.mxu0
    %260 = vdwg.mxu0
    %v261 = vrot.slane %v258, 4
    %v262 = vadd.f32 %v258, %v261
    %v263 = vrot.slane %v262, 2
    %v264 = vadd.f32 %v262, %v263
    %v265 = vrot.slane %v264, 1
    %v266 = vadd.f32 %v264, %v265
    %v267 = vmul.f32 %v258, %v258
    %v268 = vrot.slane %v267, 4
    %v269 = vadd.f32 %v267, %v268
    %v270 = vrot.slane %v269, 2
    %v271 = vadd.f32 %v269, %v270
    %v272 = vrot.slane %v271, 1
    %v273 = vadd.f32 %v271, %v272
    %v274 = vmul.f32 %v266, 0.125
    %v275 = vmul.f32 %v273, 0.125
    %v276 = vmul.f32 %v274, %v274
    %v277 = vsub.f32 %v275, %v276
    %v278 = vadd.f32 %v277, 1e-05
    %v279 = vrsqrt.pop %v278
    %v280 = vmul.f32 %v279, %v278
    %v281 = vmul.f32 %v280, %v279
    %v282 = vmul.f32 0.5, %v281
    %v283 = vsub.f32 1.5, %v282
    %v284 = vmul.f32 %v279, %v283
    %vm285 = vweird.f32 %v278
    %vm286 = vweird.f32 %v279
    %vm287 = vmor %vm285, %vm286
    %v288 = vsel %vm287, %v279, %v284
    %v289 = vmul.f32 %v196, %v288
    %v290 = vsub.f32 %v258, %v274
    %v291 = vperm.slane %v289, 0
    %v292 = vmul.f32 %v290, %v291
    %v293 = vperm.slane %v197, 0
    %v294 = vadd.f32 %v292, %v293
    %v295 = vmax.f32 %v294, 0.0
    %s296 = scalar_lea.vmem [#allocation5], 128
    %v297 = vld [vmem:[%s296] sm:$0xf]
    %v298 = vld [vmem:[%s296 + $0x4] sm:$0xf]
    %v299 = vld [vmem:[%s296 + $0x8] sm:$0xf]
    %v300 = vld [vmem:[%s296 + $0xc] sm:$0xf]
    %v301 = vld [vmem:[%s296 + $0x10] sm:$0xf]
    %v302 = vld [vmem:[%s296 + $0x14] sm:$0xf]
    %v303 = vld [vmem:[%s296 + $0x18] sm:$0xf]
    %v304 = vld [vmem:[%s296 + $0x1c] sm:$0xf]
    %v305 = vld [vmem:[%s296 + $0x20] sm:$0xf]
    %v306 = vld [vmem:[%s296 + $0x24] sm:$0xf]
    %v307 = vld [vmem:[%s296 + $0x28] sm:$0xf]
    %v308 = vld [vmem:[%s296 + $0x2c] sm:$0xf]
    %v309 = vld [vmem:[%s296 + $0x30] sm:$0xf]
    %v310 = vld [vmem:[%s296 + $0x34] sm:$0xf]
    %v311 = vld [vmem:[%s296 + $0x38] sm:$0xf]
    %v312 = vld [vmem:[%s296 + $0x3c] sm:$0xf]
    %v313 = vld [vmem:[#allocation7 + $0x6] sm:$0x1]
    %v314 = vld [vmem:[#allocation7 + $0x7] sm:$0x1]
    %v315 = vld [vmem:[#allocation7 + $0x8] sm:$0x1]
    %v316 = vpack.c.bf16 %v295, %v295
    %v317 = vperm.slane %v313, 0
    %v334 = vunpack.c.l.b16 %v297
    %v335 = vunpack.c.l.b16 %v298
    %v336 = vunpack.c.l.b16 %v299
    %v337 = vunpack.c.l.b16 %v300
    %v338 = vunpack.c.l.b16 %v301
    %v339 = vunpack.c.l.b16 %v302
    %v340 = vunpack.c.l.b16 %v303
    %v341 = vunpack.c.l.b16 %v304
    %v342 = vunpack.c.l.b16 %v305
    %v343 = vunpack.c.l.b16 %v306
    %v344 = vunpack.c.l.b16 %v307
    %v345 = vunpack.c.l.b16 %v308
    %v346 = vunpack.c.l.b16 %v309
    %v347 = vunpack.c.l.b16 %v310
    %v348 = vunpack.c.l.b16 %v311
    %v349 = vunpack.c.l.b16 %v312
    %v350 = vpack.c.b16 %v335, %v334
    %v351 = vpack.c.b16 %v337, %v336
    %v352 = vpack.c.b16 %v339, %v338
    %v353 = vpack.c.b16 %v341, %v340
    %v354 = vpack.c.b16 %v343, %v342
    %v355 = vpack.c.b16 %v345, %v344
    %v356 = vpack.c.b16 %v347, %v346
    %v357 = vpack.c.b16 %v349, %v348
    %366 = vmatpush.bf16.msra.mxu0 %v357
    %367 = vmatpush.bf16.msra.mxu0 %v356
    %368 = vmatpush.bf16.msra.mxu0 %v355
    %369 = vmatpush.bf16.msra.mxu0 %v354
    %370 = vmatpush.bf16.msra.mxu0 %v353
    %371 = vmatpush.bf16.msra.mxu0 %v352
    %372 = vmatpush.bf16.msra.mxu0 %v351
    %373 = vmatpush.bf16.msra.mxu0 %v350
    %374 = vmatmul.bf16.gmra.mxu0 %v316
    %v375 = vpop.f32.mrf.mxu0
    %v376 = vadd.f32 %v317, %v375
    %v377 = vpop.f32.mrf.mxu0
    %378 = vdwg.mxu0
    %v379 = vrot.slane %v376, 4
    %v380 = vadd.f32 %v376, %v379
    %v381 = vrot.slane %v380, 2
    %v382 = vadd.f32 %v380, %v381
    %v383 = vrot.slane %v382, 1
    %v384 = vadd.f32 %v382, %v383
    %v385 = vmul.f32 %v376, %v376
    %v386 = vrot.slane %v385, 4
    %v387 = vadd.f32 %v385, %v386
    %v388 = vrot.slane %v387, 2
    %v389 = vadd.f32 %v387, %v388
    %v390 = vrot.slane %v389, 1
    %v391 = vadd.f32 %v389, %v390
    %v392 = vmul.f32 %v384, 0.125
    %v393 = vmul.f32 %v391, 0.125
    %v394 = vmul.f32 %v392, %v392
    %v395 = vsub.f32 %v393, %v394
    %v396 = vadd.f32 %v395, 1e-05
    %v397 = vrsqrt.pop %v396
    %v398 = vmul.f32 %v397, %v396
    %v399 = vmul.f32 %v398, %v397
    %v400 = vmul.f32 0.5, %v399
    %v401 = vsub.f32 1.5, %v400
    %v402 = vmul.f32 %v397, %v401
    %vm403 = vweird.f32 %v396
    %vm404 = vweird.f32 %v397
    %vm405 = vmor %vm403, %vm404
    %v406 = vsel %vm405, %v397, %v402
    %v407 = vmul.f32 %v314, %v406
    %v408 = vsub.f32 %v376, %v392
    %v409 = vperm.slane %v407, 0
    %v410 = vmul.f32 %v408, %v409
    %v411 = vperm.slane %v315, 0
    %v412 = vadd.f32 %v410, %v411
    %v413 = vmax.f32 %v412, 0.0
    %v414 = vpack.c.bf16 %v413, %v413
    %s415 = scalar_lea.vmem [#allocation5], 192
    %v416 = vld [vmem:[%s415] sm:$0xf]
    %v417 = vld [vmem:[%s415 + $0x4] sm:$0xf]
    %v418 = vld [vmem:[%s415 + $0x8] sm:$0xf]
    %v419 = vld [vmem:[%s415 + $0xc] sm:$0xf]
    %v420 = vld [vmem:[%s415 + $0x10] sm:$0xf]
    %v421 = vld [vmem:[%s415 + $0x14] sm:$0xf]
    %v422 = vld [vmem:[%s415 + $0x18] sm:$0xf]
    %v423 = vld [vmem:[%s415 + $0x1c] sm:$0xf]
    %v424 = vld [vmem:[%s415 + $0x20] sm:$0xf]
    %v425 = vld [vmem:[%s415 + $0x24] sm:$0xf]
    %v426 = vld [vmem:[%s415 + $0x28] sm:$0xf]
    %v427 = vld [vmem:[%s415 + $0x2c] sm:$0xf]
    %v428 = vld [vmem:[%s415 + $0x30] sm:$0xf]
    %v429 = vld [vmem:[%s415 + $0x34] sm:$0xf]
    %v430 = vld [vmem:[%s415 + $0x38] sm:$0xf]
    %v431 = vld [vmem:[%s415 + $0x3c] sm:$0xf]
    %v432 = vld [vmem:[#allocation7 + $0x9] sm:$0x1]
    %v433 = vperm.slane %v432, 0
    %v450 = vunpack.c.l.b16 %v416
    %v451 = vunpack.c.l.b16 %v417
    %v452 = vunpack.c.l.b16 %v418
    %v453 = vunpack.c.l.b16 %v419
    %v454 = vunpack.c.l.b16 %v420
    %v455 = vunpack.c.l.b16 %v421
    %v456 = vunpack.c.l.b16 %v422
    %v457 = vunpack.c.l.b16 %v423
    %v458 = vunpack.c.l.b16 %v424
    %v459 = vunpack.c.l.b16 %v425
    %v460 = vunpack.c.l.b16 %v426
    %v461 = vunpack.c.l.b16 %v427
    %v462 = vunpack.c.l.b16 %v428
    %v463 = vunpack.c.l.b16 %v429
    %v464 = vunpack.c.l.b16 %v430
    %v465 = vunpack.c.l.b16 %v431
    %v466 = vpack.c.b16 %v451, %v450
    %v467 = vpack.c.b16 %v453, %v452
    %v468 = vpack.c.b16 %v455, %v454
    %v469 = vpack.c.b16 %v457, %v456
    %v470 = vpack.c.b16 %v459, %v458
    %v471 = vpack.c.b16 %v461, %v460
    %v472 = vpack.c.b16 %v463, %v462
    %v473 = vpack.c.b16 %v465, %v464
    %482 = vmatpush.bf16.msra.mxu0 %v473
    %483 = vmatpush.bf16.msra.mxu0 %v472
    %484 = vmatpush.bf16.msra.mxu0 %v471
    %485 = vmatpush.bf16.msra.mxu0 %v470
    %486 = vmatpush.bf16.msra.mxu0 %v469
    %487 = vmatpush.bf16.msra.mxu0 %v468
    %488 = vmatpush.bf16.msra.mxu0 %v467
    %489 = vmatpush.bf16.msra.mxu0 %v466
    %490 = vmatmul.bf16.gmra.mxu0 %v414
    %v491 = vpop.f32.mrf.mxu0
    %v492 = vadd.f32 %v433, %v491
    %v493 = vpop.f32.mrf.mxu0
    %494 = vdwg.mxu0
    %495 = vmax.xlane.f32.xlu0 %v492
    %v496 = vpop.xlane.xlu0 %495
    %v497 = vsub.f32 %v492, %v496
    %v498 = vmul.f32 %v497, 1.442695
    %v499 = vpow.pop %v498
    %500 = vadd.xlane.f32.xlu0 %v499
    %v501 = vpop.xlane.xlu0 %500
    %v502 = vlog2.pop %v501
    %v503 = vmul.f32 %v502, 0.6931472
    %v504 = vsub.f32 %v497, %v503
    %505 = vst [vmem:[#allocation8] sm:$0xff] %v504
    // Predicated region
    $region26: #{tpu_custom_call.1} parent=1 // pred_check
      _
    $region27: #{tpu_custom_call.1} parent=1 // pred_check_branch
      %507 = sbr.rel (0) target = $region29
    $region28: #{tpu_custom_call.1} parent=1 // pred_region
      %509 = vsyncadd [#allocation4], 0
      %s511 = sshll.u32 [#allocation8], 4
      %s512 = int_to_ptr.vmem [resolvable:$true] %s511
      %s513 = sshll.u32 %s3, 4
      %s514 = int_to_ptr.hbm [resolvable:$true] %s513
      %516 = dma.vmem_to_hbm [thread:$0]  %s512, 128, %s514, [#allocation4]
    $region29: #{tpu_custom_call.1} parent=1 // pred_fallthru
      _
    // Predicated region
    $region30: #{tpu_custom_call.1} parent=1 // pred_check
      _
    $region31: #{tpu_custom_call.1} parent=1 // pred_check_branch
      %518 = sbr.rel (0) target = $region33
    $region32: #{tpu_custom_call.1} parent=1 // pred_region
      %520 = dma.done [#allocation4], 128
    $region33: #{tpu_custom_call.1} parent=1 // pred_fallthru
      _
    %521 = vsyncpa [#allocation3], 1
    %522 = vsyncpa [#allocation6], 1
    %523 = vsyncpa [#allocation4], 1

</llo_original>
